<compile_context>
chip_gen: v5e
topology: v5e:2x2
jax: 0.10.0
libtpu: 0.0.40
codegen_flags: <defaults>
</compile_context>

<pallas_src>
import functools
import math

import jax
import jax.numpy as jnp
from jax.experimental import pallas as pl
from jax.experimental.pallas import tpu as pltpu


def _mask_pool_kernel(x_ref, m_ref, o_ref, acc_ref, den_ref, *,
                      hard_pooling, mask_threshold, dot_dtype,
                      n_valid, tile_n, ragged):
    # x_ref: [1, C, tn]   m_ref: [1, tq, tn]   o_ref: [1, tq, C]
    # acc_ref: [tq, C] f32 scratch   den_ref: [tq, 1] f32 scratch
    k = pl.program_id(2)

    @pl.when(k == 0)
    def _():
        acc_ref[...] = jnp.zeros_like(acc_ref)
        den_ref[...] = jnp.zeros_like(den_ref)

    m_raw = m_ref[0]                                       # [tq, tn]
    x_cn = x_ref[0]                                        # [C, tn]
    dd = x_cn.dtype if dot_dtype is None else dot_dtype

    if ragged:
        # Last spatial tile is partial: mask lanes >= N.  Mask BOTH operands so
        # stale VMEM garbage (possibly NaN) in the clipped tail cannot leak.
        base = k * tile_n
        lane_m = jax.lax.broadcasted_iota(jnp.int32, m_raw.shape, 1)
        valid_m = (base + lane_m) < n_valid                # [tq, tn] bool
        lane_x = jax.lax.broadcasted_iota(jnp.int32, x_cn.shape, 1)
        valid_x = (base + lane_x) < n_valid                # [C, tn] bool
        x_cn = jnp.where(valid_x, x_cn, jnp.zeros_like(x_cn))

    if hard_pooling:
        # sigmoid(m) > thr  <=>  m > logit(thr): VPU compare, no EUP sigmoid.
        logit_thr = math.log(mask_threshold / (1.0 - mask_threshold))
        cmp = m_raw > jnp.array(logit_thr, dtype=m_raw.dtype)   # bool [tq, tn]
        if ragged:
            cmp = jnp.logical_and(cmp, valid_m)
        # f32-accumulated count of the boolean (exact), no f32 mask temp.
        den_ref[...] += jnp.sum(cmp, axis=-1, keepdims=True, dtype=jnp.float32)
        m_dot = cmp.astype(dd)                              # MXU operand directly
    else:
        # TODO(synk): bf16 sigmoid on v6e/v7x (bf16 EUP) would halve EUP pushes;
        # kept in f32 for exactness and v5e compatibility.
        m_f32 = jax.nn.sigmoid(m_raw.astype(jnp.float32))
        if ragged:
            m_f32 = jnp.where(valid_m, m_f32, jnp.zeros_like(m_f32))
        den_ref[...] += jnp.sum(m_f32, axis=-1, keepdims=True)
        m_dot = m_f32.astype(dd)

    # [tq, tn] x [C, tn] -> [tq, C], contracting the spatial tile on the MXU.
    acc_ref[...] += jax.lax.dot_general(
        m_dot, x_cn.astype(dd),
        dimension_numbers=(((1,), (1,)), ((), ())),
        preferred_element_type=jnp.float32)

    @pl.when(k == pl.num_programs(2) - 1)
    def _():
        inv = 1.0 / (den_ref[...] + 1e-8)                   # only tq values
        o_ref[0] = (acc_ref[...] * inv).astype(o_ref.dtype)


def _vmem_capacity_bytes():
    """Physical VMEM of the current chip; conservative 64 MiB (v7x) fallback."""
    try:
        return int(pltpu.get_tpu_info().vmem_capacity_bytes)
    except Exception:
        return 64 * 1024 * 1024


def _num_tensorcores():
    """Best-effort TensorCore count per device (v7x has 2); safe default 1."""
    try:
        d = jax.devices()[0]
        for attr in ("num_cores", "core_count"):
            v = getattr(d, attr, None)
            if isinstance(v, int) and v > 0:
                return v
    except Exception:
        pass
    return 1


def _pick_tile_q(Q, B, n_cores):
    """Largest Q tile: the x BlockSpec ignores q, so every extra q tile
    re-streams x from HBM.  tq = Q (n_q == 1) whenever Q is reasonable."""
    tq = Q if Q <= 512 else 256                 # 256 is a multiple of 8
    # v7x: make sure B * n_q >= n_cores so no TensorCore idles.
    if n_cores > 1 and B * pl.cdiv(Q, tq) < n_cores and Q >= 8 * n_cores:
        tq = 8 * pl.cdiv(pl.cdiv(Q, n_cores), 8)   # multiple of 8, ~Q/n_cores
    return tq


def _pick_tile_n(N, C, tq, itemsize, budget_bytes, max_tile_n=None):
    """Spatial tile: prefer tn = N (no reduction loop), else a divisor of N,
    else a power-of-two tile with ragged in-kernel masking.  Budget covers the
    double-buffered x+mask tiles plus in-kernel f32/bf16 temps."""
    per_n = (C + tq) * (2 * itemsize + 6)
    cap = 8192
    while cap > 128 and per_n * cap > budget_bytes:
        cap //= 2
    if max_tile_n is not None:
        cap = max(128, min(cap, max_tile_n))
    if N <= cap:
        return N, False                          # whole spatial extent
    for tn in (cap, cap // 2, cap // 4):         # avoid ragged tail if possible
        if tn >= 128 and N % tn == 0:
            return tn, False
    return cap, True                             # ragged: mask tail in-kernel


def mask_pooling(x, mask, *, hard_pooling=True, mask_threshold=0.5,
                 dot_dtype=jnp.bfloat16, out_dtype=jnp.float32,
                 mask_buffers=2, max_tile_n=None):
    """x: [B, C, H, W], mask: [B, Q, H, W] -> {'mask_pooled_features': [B, Q, C]}."""
    assert x.shape[-2:] == mask.shape[-2:]
    B, C, H, W = x.shape
    Q = mask.shape[1]
    N = H * W

    # Free, contiguous reshapes (no HBM transpose, no padding pass).
    x_cn = x.reshape(B, C, N)        # [B, C, N]  (C stays the matmul output axis)
    m_qn = mask.reshape(B, Q, N)     # [B, Q, N]

    vmem_phys = _vmem_capacity_bytes()
    n_cores = _num_tensorcores()

    tq = _pick_tile_q(Q, B, n_cores)
    tn, ragged = _pick_tile_n(
        N, C, tq, max(x.dtype.itemsize, mask.dtype.itemsize),
        budget_bytes=int(vmem_phys * 0.30), max_tile_n=max_tile_n)

    n_q = pl.cdiv(Q, tq)
    n_n = pl.cdiv(N, tn)

    kernel = functools.partial(
        _mask_pool_kernel,
        hard_pooling=hard_pooling,
        mask_threshold=mask_threshold,
        dot_dtype=dot_dtype,
        n_valid=N,
        tile_n=tn,
        ragged=ragged,
    )

    cost = pl.CostEstimate(
        flops=2 * B * Q * N * C,
        transcendentals=0 if hard_pooling else B * Q * N,
        bytes_accessed=int(x_cn.size * x_cn.dtype.itemsize * n_q
                           + m_qn.size * m_qn.dtype.itemsize
                           + B * Q * C * jnp.dtype(out_dtype).itemsize),
    )

    mask_spec_kwargs = {}
    if mask_buffers > 2:
        # Extra pipeline depth hides DMA bubbles when per-step compute is tiny
        # (small C); off by default, only worth it where VMEM has headroom.
        mask_spec_kwargs["pipeline_mode"] = pl.Buffered(mask_buffers)

    out = pl.pallas_call(
        kernel,
        out_shape=jax.ShapeDtypeStruct((B, Q, C), out_dtype),
        grid_spec=pltpu.PrefetchScalarGridSpec(
            num_scalar_prefetch=0,
            grid=(B, n_q, n_n),                       # reduction axis last
            in_specs=[
                pl.BlockSpec((1, C, tn), lambda b, q, k: (b, 0, k)),
                pl.BlockSpec((1, tq, tn), lambda b, q, k: (b, q, k),
                             **mask_spec_kwargs),
            ],
            out_specs=pl.BlockSpec((1, tq, C), lambda b, q, k: (b, q, 0)),
            scratch_shapes=[
                pltpu.VMEM((tq, C), jnp.float32),     # pooled accumulator
                pltpu.VMEM((tq, 1), jnp.float32),     # denorm accumulator
            ],
        ),
        compiler_params=pltpu.CompilerParams(
            dimension_semantics=("parallel", "parallel", "arbitrary"),
            vmem_limit_bytes=int(vmem_phys * 0.8),
        ),
        cost_estimate=cost,
    )(x_cn, m_qn)
    return {"mask_pooled_features": out}


def _reference(x, mask, *, hard_pooling=True, mask_threshold=0.5):
    m = jax.nn.sigmoid(mask.astype(jnp.float32))
    if hard_pooling:
        m = (m > mask_threshold).astype(jnp.float32)
    denorm = m.sum(axis=(-1, -2), keepdims=True) + 1e-8
    return jnp.einsum("bchw,bqhw->bqc", x.astype(jnp.float32), m / denorm,
                      precision=jax.lax.Precision.HIGHEST)


if __name__ == "__main__":
    key = jax.random.PRNGKey(0)
    kx, km = jax.random.split(key)

    # Case 1: clean tiling (tn == N, single reduction step).
    B, C, H, W, Q = 2, 32, 16, 16, 8
    x = jax.random.normal(kx, (B, C, H, W), dtype=jnp.float32)
    mask = jax.random.normal(km, (B, Q, H, W), dtype=jnp.float32)
    for hard in (True, False):
        out = mask_pooling(x, mask, hard_pooling=hard, mask_threshold=0.5)
        pooled = jax.block_until_ready(out["mask_pooled_features"])
        ref = _reference(x, mask, hard_pooling=hard, mask_threshold=0.5)
        assert pooled.shape == (B, Q, C), pooled.shape
        err = float(jnp.max(jnp.abs(pooled - ref)))
        assert err < 5e-3, (hard, err)

    # Case 2: ragged spatial tail (N = 130 with a forced 128 tile) to exercise
    # the in-kernel lane-mask path that replaced the wrapper jnp.pad.
    B2, C2, H2, W2, Q2 = 1, 16, 10, 13, 8
    kx2, km2 = jax.random.split(km)
    x2 = jax.random.normal(kx2, (B2, C2, H2, W2), dtype=jnp.float32)
    m2 = jax.random.normal(km2, (B2, Q2, H2, W2), dtype=jnp.float32)
    for hard in (True, False):
        out = mask_pooling(x2, m2, hard_pooling=hard, mask_threshold=0.5,
                           max_tile_n=128)
        pooled = jax.block_until_ready(out["mask_pooled_features"])
        ref = _reference(x2, m2, hard_pooling=hard, mask_threshold=0.5)
        assert pooled.shape == (B2, Q2, C2), pooled.shape
        err = float(jnp.max(jnp.abs(pooled - ref)))
        assert err < 5e-3, ("ragged", hard, err)

    print("KERNEL_OK")
</pallas_src>

<mosaic_0001>
module attributes {stable_mosaic.version = 11 : i64} {
  func.func @_mask_pool_kernel(%arg0: i32, %arg1: i32, %arg2: i32, %arg3: memref<1x32x256xf32, #tpu.memory_space<vmem>>, %arg4: memref<1x8x256xf32, #tpu.memory_space<vmem>>, %arg5: memref<1x8x32xf32, #tpu.memory_space<vmem>>, %arg6: memref<8x32xf32, #tpu.memory_space<vmem>>, %arg7: memref<8x1xf32, #tpu.memory_space<vmem>>) attributes {dimension_semantics = [#tpu.dimension_semantics<parallel>, #tpu.dimension_semantics<parallel>, #tpu.dimension_semantics<arbitrary>], iteration_bounds = array<i64: 2, 1, 1>, scalar_prefetch = 0 : i64, scratch_operands = 2 : i64, tpu.core_type = #tpu.core_type<tc>, window_params = [{transform_indices = @transform_0, window_bounds = array<i64: 1, 32, 256>}, {transform_indices = @transform_1, window_bounds = array<i64: 1, 8, 256>}, {transform_indices = @transform_2, window_bounds = array<i64: 1, 8, 32>}]} {
    %c0_i32 = arith.constant 0 : i32
    %0 = arith.cmpi eq, %arg2, %c0_i32 : i32
    %1 = arith.extui %0 : i1 to i32
    %c0_i32_0 = arith.constant 0 : i32
    %2 = arith.cmpi ne, %1, %c0_i32_0 : i32
    scf.if %2 {
      %cst_18 = arith.constant 0.000000e+00 : f32
      %27 = vector.broadcast %cst_18 : f32 to vector<8x32xf32>
      %c0_19 = arith.constant 0 : index
      %c0_20 = arith.constant 0 : index
      %28 = vector.load %arg6[%c0_19, %c0_20] : memref<8x32xf32, #tpu.memory_space<vmem>>, vector<8x32xf32>
      tpu.vector_store %arg6[%c0_19, %c0_20], %27 {strides = array<i32>} : memref<8x32xf32, #tpu.memory_space<vmem>>, vector<8x32xf32>,
      %cst_21 = arith.constant 0.000000e+00 : f32
      %29 = vector.broadcast %cst_21 : f32 to vector<8x1xf32>
      %c0_22 = arith.constant 0 : index
      %c0_23 = arith.constant 0 : index
      %30 = vector.load %arg7[%c0_22, %c0_23] : memref<8x1xf32, #tpu.memory_space<vmem>>, vector<8x1xf32>
      tpu.vector_store %arg7[%c0_22, %c0_23], %29 {strides = array<i32>} : memref<8x1xf32, #tpu.memory_space<vmem>>, vector<8x1xf32>,
    } else {
    }
    %c0 = arith.constant 0 : index
    %c0_1 = arith.constant 0 : index
    %c0_2 = arith.constant 0 : index
    %3 = vector.load %arg4[%c0, %c0_1, %c0_2] : memref<1x8x256xf32, #tpu.memory_space<vmem>>, vector<1x8x256xf32>
    %4 = vector.shape_cast %3 : vector<1x8x256xf32> to vector<8x256xf32>
    %c0_3 = arith.constant 0 : index
    %c0_4 = arith.constant 0 : index
    %c0_5 = arith.constant 0 : index
    %5 = vector.load %arg3[%c0_3, %c0_4, %c0_5] : memref<1x32x256xf32, #tpu.memory_space<vmem>>, vector<1x32x256xf32>
    %6 = vector.shape_cast %5 : vector<1x32x256xf32> to vector<32x256xf32>
    %cst = arith.constant 0.000000e+00 : f32
    %7 = vector.broadcast %cst : f32 to vector<8x256xf32>
    %8 = arith.cmpf ogt, %4, %7 : vector<8x256xf32>
    %c0_6 = arith.constant 0 : index
    %c0_7 = arith.constant 0 : index
    %9 = vector.load %arg7[%c0_6, %c0_7] : memref<8x1xf32, #tpu.memory_space<vmem>>, vector<8x1xf32>
    %10 = arith.extui %8 : vector<8x256xi1> to vector<8x256xi32>
    %11 = arith.sitofp %10 : vector<8x256xi32> to vector<8x256xf32>
    %cst_8 = arith.constant dense<0.000000e+00> : vector<8xf32>
    %12 = vector.multi_reduction <add>, %11, %cst_8 [1] : vector<8x256xf32> to vector<8xf32>
    %13 = vector.shape_cast %12 : vector<8xf32> to vector<8x1xf32>
    %14 = arith.addf %9, %13 : vector<8x1xf32>
    %c0_9 = arith.constant 0 : index
    %c0_10 = arith.constant 0 : index
    %15 = vector.load %arg7[%c0_9, %c0_10] : memref<8x1xf32, #tpu.memory_space<vmem>>, vector<8x1xf32>
    tpu.vector_store %arg7[%c0_9, %c0_10], %14 {strides = array<i32>} : memref<8x1xf32, #tpu.memory_space<vmem>>, vector<8x1xf32>,
    %16 = arith.extui %8 : vector<8x256xi1> to vector<8x256xi32>
    %17 = arith.sitofp %16 : vector<8x256xi32> to vector<8x256xf32>
    %18 = arith.truncf %17 : vector<8x256xf32> to vector<8x256xbf16>
    %c0_11 = arith.constant 0 : index
    %c0_12 = arith.constant 0 : index
    %19 = vector.load %arg6[%c0_11, %c0_12] : memref<8x32xf32, #tpu.memory_space<vmem>>, vector<8x32xf32>
    %20 = arith.truncf %6 : vector<32x256xf32> to vector<32x256xbf16>
    %cst_13 = arith.constant dense<0.000000e+00> : vector<8x32xf32>
    %21 = tpu.matmul %18, %20, %cst_13 {dimension_numbers = #tpu.dot_dimension_numbers<[1], [1], [0], [0], [0, 0, 1, 0], [], []>} : vector<8x256xbf16>, vector<32x256xbf16>, vector<8x32xf32> -> vector<8x32xf32>
    %22 = arith.addf %19, %21 : vector<8x32xf32>
    %c0_14 = arith.constant 0 : index
    %c0_15 = arith.constant 0 : index
    %23 = vector.load %arg6[%c0_14, %c0_15] : memref<8x32xf32, #tpu.memory_space<vmem>>, vector<8x32xf32>
    tpu.vector_store %arg6[%c0_14, %c0_15], %22 {strides = array<i32>} : memref<8x32xf32, #tpu.memory_space<vmem>>, vector<8x32xf32>,
    %c0_i32_16 = arith.constant 0 : i32
    %24 = arith.cmpi eq, %arg2, %c0_i32_16 : i32
    %25 = arith.extui %24 : i1 to i32
    %c0_i32_17 = arith.constant 0 : i32
    %26 = arith.cmpi ne, %25, %c0_i32_17 : i32
    scf.if %26 {
      %c0_18 = arith.constant 0 : index
      %c0_19 = arith.constant 0 : index
      %27 = vector.load %arg7[%c0_18, %c0_19] : memref<8x1xf32, #tpu.memory_space<vmem>>, vector<8x1xf32>
      %cst_20 = arith.constant 9.99999993E-9 : f32
      %28 = vector.broadcast %cst_20 : f32 to vector<8x1xf32>
      %29 = arith.addf %27, %28 : vector<8x1xf32>
      %cst_21 = arith.constant 1.000000e+00 : f32
      %30 = vector.broadcast %cst_21 : f32 to vector<8x1xf32>
      %31 = arith.divf %30, %29 : vector<8x1xf32>
      %c0_22 = arith.constant 0 : index
      %c0_23 = arith.constant 0 : index
      %32 = vector.load %arg6[%c0_22, %c0_23] : memref<8x32xf32, #tpu.memory_space<vmem>>, vector<8x32xf32>
      %33 = vector.broadcast %31 : vector<8x1xf32> to vector<8x32xf32>
      %34 = arith.mulf %32, %33 : vector<8x32xf32>
      %c0_24 = arith.constant 0 : index
      %c0_25 = arith.constant 0 : index
      %c0_26 = arith.constant 0 : index
      %35 = vector.load %arg5[%c0_24, %c0_25, %c0_26] : memref<1x8x32xf32, #tpu.memory_space<vmem>>, vector<1x8x32xf32>
      %36 = vector.shape_cast %35 : vector<1x8x32xf32> to vector<8x32xf32>
      %37 = vector.shape_cast %34 : vector<8x32xf32> to vector<1x8x32xf32>
      tpu.vector_store %arg5[%c0_24, %c0_25, %c0_26], %37 {strides = array<i32>} : memref<1x8x32xf32, #tpu.memory_space<vmem>>, vector<1x8x32xf32>,
    } else {
    }
    return
  }
  func.func @transform_0(%arg0: i32, %arg1: i32, %arg2: i32) -> (i32, i32, i32) {
    %c0_i32 = arith.constant 0 : i32
    %c0_i32_0 = arith.constant 0 : i32
    return %arg0, %c0_i32, %arg2 : i32, i32, i32
  }
  func.func @transform_1(%arg0: i32, %arg1: i32, %arg2: i32) -> (i32, i32, i32) {
    %c0_i32 = arith.constant 0 : i32
    return %arg0, %arg1, %arg2 : i32, i32, i32
  }
  func.func @transform_2(%arg0: i32, %arg1: i32, %arg2: i32) -> (i32, i32, i32) {
    %c0_i32 = arith.constant 0 : i32
    %c0_i32_0 = arith.constant 0 : i32
    return %arg0, %arg1, %c0_i32 : i32, i32, i32
  }
}

</mosaic_0001>

<llo_original>
// kernel: tpu_custom_call.1
$region0: #{tpu_custom_call.1}
  #allocation0 [shape = 'u32[]', space=smem, size = 0x4, offset = 0x4, fixed_abs, tag = 'smem constant byte address 0x4 - core index']
  #allocation1 [shape = 'u32[72,128]{1,0:T(1,128)}', space=vmem, size = 0x9000, scoped, tag = 'internal scratch']
  #allocation2 [shape = 'f32[8,32]{1,0:T(8,128)}', space=vmem, size = 0x1000, scoped, tag = 'scratch operand']
  #allocation3 [shape = 'f32[8,1]{1,0:T(8,128)}', space=vmem, size = 0x1000, scoped, tag = 'scratch operand']
  %s0 = inlined_call_operand.hbm [shape: f32[2,32,256], index: 0, kind: input, shape index: {}]
  %s1 = inlined_call_operand.hbm [shape: f32[2,8,256], index: 1, kind: input, shape index: {}]
  %s2 = inlined_call_operand.hbm [shape: f32[2,8,32], index: 2, kind: output, shape index: {}]
  %s3 = sld [smem:[#allocation0]]
  $region57: #{tpu_custom_call.1} parent=0
    _
  %s5 = ssub.s32 1, %s3
  %s6 = scalar_select 0, %s5, %s3
  $region1: #{tpu_custom_call.1} parent=0
    #allocation4 [shape = 'u8[65536]{0}', space=vmem, size = 0x10000, scoped, tag = 'input window, operand 0']
    #allocation5 [shape = 's32[2]{0}', space=sflag, size = 0x8, scoped, tag = 'scoped memory for tpu_custom_call.1']
    #allocation6 [shape = 's32[2]{0}', space=sflag, size = 0x8, scoped, tag = 'scoped memory for tpu_custom_call.1']
    #allocation7 [shape = 'u8[16384]{0}', space=vmem, size = 0x4000, scoped, tag = 'input window, operand 1']
    #allocation8 [shape = 's32[2]{0}', space=sflag, size = 0x8, scoped, tag = 'scoped memory for tpu_custom_call.1']
    #allocation9 [shape = 'u8[8192]{0}', space=vmem, size = 0x2000, scoped, tag = 'output window, operand 0']
    %7 = vsyncpa [#allocation5], 0
    %s8 = scalar_lea.sflag [#allocation5], 1
    %9 = vsyncpa %s8, 0
    %10 = vsyncpa [#allocation8], 0
    %s11 = scalar_lea.sflag [#allocation8], 1
    %12 = vsyncpa %s11, 0
    %13 = vsyncpa [#allocation6], 0
    %s14 = scalar_lea.sflag [#allocation6], 1
    %15 = vsyncpa %s14, 0
    loop: start=0, step=1, limit=4
    $region2: #{tpu_custom_call.1} parent=1 // loop_pre_header
      _
    $region3: #{tpu_custom_call.1} parent=1 // loop_header
      %s17 = sphi 0, %s21
      %p18 = scmp.ge.s32.totalorder %s17, 4
      %s24 = sphi 0, %s43
      %s25 = sphi 0, %s39
      %s26 = sphi 0, %s35
      %s27 = sphi 0, %s24
      %s28 = sphi 0, %s25
      %s29 = sphi 0, %s26
      %s30 = sphi 0, %s27
      %s31 = sphi 0, %s28
      %s32 = sphi 0, %s29
      %s48 = sphi 0, %s50
      %s51 = sphi 0, %s48
      %s52 = sphi 0, %s51
      %s68 = sphi 0, %s52
      %s78 = sphi 0, %s80
      %s81 = sphi 0, %s78
      %s82 = sphi 0, %s81
      %s98 = sphi 0, %s82
      %s106 = sphi 0, %s108
      %s109 = sphi 0, %s106
      %s110 = sphi 0, %s109
      %s126 = sphi 0, %s110
    $region4: #{tpu_custom_call.1} parent=1 // loop_header_branch
      %20 = sbr.rel (%p18) target = $region8
    $region5: #{tpu_custom_call.1} parent=1 // loop_body
      %s22 = ssub.s32 %s17, 1
      %s23 = ssub.s32 %s17, 2
      %s33 = sadd.s32 1, %s26
      %p34 = scmp.ge.s32.totalorder %s33, 1
      %s35 = scalar_select %p34, 0, %s33
      %s36 = sadd.s32 1, %s25
      %s37 = scalar_select %p34, %s36, %s25
      %p38 = scmp.ge.s32.totalorder %s37, 1
      %s39 = scalar_select %p38, 0, %s37
      %s40 = sadd.s32 1, %s24
      %s41 = scalar_select %p38, %s40, %s24
      %p42 = scmp.ge.s32.totalorder %s41, 2
      %s43 = scalar_select %p42, 0, %s41
      %s44 = ssub.s32 %s24, %s43
      %s45 = ssub.s32 %s26, %s35
      %s46 = sor.u32 %s44, %s45
      %p47 = scmp.eq.s32.totalorder %s46, 0
      %s49 = sadd.s32 %s48, 1
      %s50 = scalar_select %p47, %s48, %s49
      %p53 = pneg %p47
      %p54 = scmp.eq.s32.totalorder %s17, 1
      %p55 = por %p53, %p54
      %p56 = scmp.ne.s32.totalorder %s48, %s51
      %p57 = scmp.eq.s32.totalorder %s17, 0
      %p58 = por %p56, %p57
      %p59 = scmp.ne.s32.totalorder %s48, %s51
      %p60 = scmp.eq.s32.totalorder %s22, 1
      %p61 = por %p59, %p60
      %p62 = scmp.ne.s32.totalorder %s51, %s52
      %p63 = scmp.eq.s32.totalorder %s22, 0
      %p64 = por %p62, %p63
      %p65 = scmp.ne.s32.totalorder %s51, %s52
      %p66 = scmp.eq.s32.totalorder %s23, 1
      %p67 = por %p65, %p66
      %p69 = scmp.ne.s32.totalorder %s52, %s68
      %p70 = scmp.eq.s32.totalorder %s23, 0
      %p71 = por %p69, %p70
      %s72 = ssub.s32 %s24, %s43
      %s73 = ssub.s32 %s25, %s39
      %s74 = sor.u32 %s72, %s73
      %s75 = ssub.s32 %s26, %s35
      %s76 = sor.u32 %s74, %s75
      %p77 = scmp.eq.s32.totalorder %s76, 0
      %s79 = sadd.s32 %s78, 1
      %s80 = scalar_select %p77, %s78, %s79
      %p83 = pneg %p77
      %p84 = scmp.eq.s32.totalorder %s17, 1
      %p85 = por %p83, %p84
      %p86 = scmp.ne.s32.totalorder %s78, %s81
      %p87 = scmp.eq.s32.totalorder %s17, 0
      %p88 = por %p86, %p87
      %p89 = scmp.ne.s32.totalorder %s78, %s81
      %p90 = scmp.eq.s32.totalorder %s22, 1
      %p91 = por %p89, %p90
      %p92 = scmp.ne.s32.totalorder %s81, %s82
      %p93 = scmp.eq.s32.totalorder %s22, 0
      %p94 = por %p92, %p93
      %p95 = scmp.ne.s32.totalorder %s81, %s82
      %p96 = scmp.eq.s32.totalorder %s23, 1
      %p97 = por %p95, %p96
      %p99 = scmp.ne.s32.totalorder %s82, %s98
      %p100 = scmp.eq.s32.totalorder %s23, 0
      %p101 = por %p99, %p100
      %s102 = ssub.s32 %s24, %s43
      %s103 = ssub.s32 %s25, %s39
      %s104 = sor.u32 %s102, %s103
      %p105 = scmp.eq.s32.totalorder %s104, 0
      %s107 = sadd.s32 %s106, 1
      %s108 = scalar_select %p105, %s106, %s107
      %p111 = pneg %p105
      %p112 = scmp.eq.s32.totalorder %s17, 1
      %p113 = por %p111, %p112
      %p114 = scmp.ne.s32.totalorder %s106, %s109
      %p115 = scmp.eq.s32.totalorder %s17, 0
      %p116 = por %p114, %p115
      %p117 = scmp.ne.s32.totalorder %s106, %s109
      %p118 = scmp.eq.s32.totalorder %s22, 1
      %p119 = por %p117, %p118
      %p120 = scmp.ne.s32.totalorder %s109, %s110
      %p121 = scmp.eq.s32.totalorder %s22, 0
      %p122 = por %p120, %p121
      %p123 = scmp.ne.s32.totalorder %s109, %s110
      %p124 = scmp.eq.s32.totalorder %s23, 1
      %p125 = por %p123, %p124
      %p127 = scmp.ne.s32.totalorder %s110, %s126
      %p128 = scmp.eq.s32.totalorder %s23, 0
      %p129 = por %p127, %p128
      %p130 = scmp.le.s32.totalorder 1, %s17
      %p131 = scmp.lt.s32.totalorder %s17, 3
      %p132 = pnand %p130, %p131
      %p133 = pneg %p132
      // Predicated region
      $region9: #{tpu_custom_call.1} parent=5 // pred_check
        _
      $region10: #{tpu_custom_call.1} parent=5 // pred_check_branch
        %135 = sbr.rel (%p132) target = $region12
      $region11: #{tpu_custom_call.1} parent=5 // pred_region
        %s136 = ssub.s32 %s17, 1
      $region12: #{tpu_custom_call.1} parent=5 // pred_fallthru
        _
      %p137 = scmp.lt.s32.totalorder %s17, 2
      // Predicated region
      $region13: #{tpu_custom_call.1} parent=5 // pred_check
        %p138 = pneg %p137
      $region14: #{tpu_custom_call.1} parent=5 // pred_check_branch
        %140 = sbr.rel (%p138) target = $region16
      $region15: #{tpu_custom_call.1} parent=5 // pred_region
        // Predicated region
        $region17: #{tpu_custom_call.1} parent=15 // pred_check
          %p141 = pneg %p58
        $region18: #{tpu_custom_call.1} parent=15 // pred_check_branch
          %143 = sbr.rel (%p141) target = $region20
        $region19: #{tpu_custom_call.1} parent=15 // pred_region
          %s144 = sand.u32 %s48, 1
          %s145 = scalar_lea.sflag [#allocation5], %s144
          %s146 = sand.u32 %s48, 1
          %s147 = smul.addr %s146, 64
          %s148 = scalar_lea.vmem [#allocation4], %s147
          %s149 = smul.u32 2, %s26
          %151 = vsyncadd %s145, 0
          %s152 = smul.addr %s24, 8
          %s153 = sadd.s32 %s149, %s152
          %s154 = smul.addr %s153, 8
          %s155 = scalar_lea.hbm %s0, %s154
          %s156 = sshll.u32 %s155, 4
          %s157 = int_to_ptr.hbm [resolvable:$true] %s156
          %s158 = sshll.u32 %s148, 4
          %s159 = int_to_ptr.vmem [resolvable:$true] %s158
          %164 = dma.hbm_to_vmem [thread:$0]  %s157, 1024, %s159, %s145, 256, 256, 16
        $region20: #{tpu_custom_call.1} parent=15 // pred_fallthru
          _
        // Predicated region
        $region21: #{tpu_custom_call.1} parent=15 // pred_check
          %p165 = pneg %p88
        $region22: #{tpu_custom_call.1} parent=15 // pred_check_branch
          %167 = sbr.rel (%p165) target = $region24
        $region23: #{tpu_custom_call.1} parent=15 // pred_region
          %s168 = sand.u32 %s78, 1
          %s169 = scalar_lea.sflag [#allocation8], %s168
          %s170 = sand.u32 %s78, 1
          %s171 = smul.addr %s170, 16
          %s172 = scalar_lea.vmem [#allocation7], %s171
          %s173 = smul.u32 2, %s26
          %175 = vsyncadd %s169, 0
          %s176 = smul.addr %s25, 2
          %s177 = sadd.s32 %s173, %s176
          %s178 = smul.addr %s24, 2
          %s179 = sadd.s32 %s177, %s178
          %s180 = smul.addr %s179, 8
          %s181 = scalar_lea.hbm %s1, %s180
          %s183 = sshll.u32 %s181, 4
          %s184 = int_to_ptr.hbm [resolvable:$true] %s183
          %s185 = sshll.u32 %s172, 4
          %s186 = int_to_ptr.vmem [resolvable:$true] %s185
          %188 = dma.hbm_to_vmem [thread:$0]  %s184, 256, %s186, %s169
        $region24: #{tpu_custom_call.1} parent=15 // pred_fallthru
          _
      $region16: #{tpu_custom_call.1} parent=5 // pred_fallthru
        _
      %p189 = scmp.le.s32.totalorder 1, %s17
      %p190 = scmp.lt.s32.totalorder %s17, 3
      %p191 = pnand %p189, %p190
      %p192 = pneg %p191
      // Predicated region
      $region25: #{tpu_custom_call.1} parent=5 // pred_check
        _
      $region26: #{tpu_custom_call.1} parent=5 // pred_check_branch
        %194 = sbr.rel (%p191) target = $region28
      $region27: #{tpu_custom_call.1} parent=5 // pred_region
        %s195 = ssub.s32 %s17, 1
        %s196 = sand.u32 %s51, 1
        %s197 = scalar_lea.sflag [#allocation5], %s196
        %s198 = sand.u32 %s51, 1
        %s199 = smul.addr %s198, 64
        %s200 = scalar_lea.vmem [#allocation4], %s199
        // Predicated region
        $region29: #{tpu_custom_call.1} parent=27 // pred_check
          %p201 = pneg %p64
        $region30: #{tpu_custom_call.1} parent=27 // pred_check_branch
          %203 = sbr.rel (%p201) target = $region32
        $region31: #{tpu_custom_call.1} parent=27 // pred_region
          %205 = dma.done %s197, 1024
        $region32: #{tpu_custom_call.1} parent=27 // pred_fallthru
          _
        %s206 = sand.u32 %s81, 1
        %s207 = scalar_lea.sflag [#allocation8], %s206
        %s208 = sand.u32 %s81, 1
        %s209 = smul.addr %s208, 16
        %s210 = scalar_lea.vmem [#allocation7], %s209
        // Predicated region
        $region33: #{tpu_custom_call.1} parent=27 // pred_check
          %p211 = pneg %p94
        $region34: #{tpu_custom_call.1} parent=27 // pred_check_branch
          %213 = sbr.rel (%p211) target = $region36
        $region35: #{tpu_custom_call.1} parent=27 // pred_region
          %215 = dma.done %s207, 256
        $region36: #{tpu_custom_call.1} parent=27 // pred_fallthru
          _
        %s216 = sand.u32 %s51, 1
        %s217 = scalar_lea.sflag [#allocation5], %s216
        %s218 = sand.u32 %s51, 1
        %s219 = smul.addr %s218, 64
        %s220 = scalar_lea.vmem [#allocation4], %s219
        %p221 = pneg %p64
        %p222 = pneg %p61
        %s223 = sand.u32 %s81, 1
        %s224 = scalar_lea.sflag [#allocation8], %s223
        %s225 = sand.u32 %s81, 1
        %s226 = smul.addr %s225, 16
        %s227 = scalar_lea.vmem [#allocation7], %s226
        %p228 = pneg %p94
        %p229 = pneg %p91
        %p230 = pneg %p122
        %p231 = pneg %p119
        %s232 = sand.u32 %s109, 1
        %s233 = scalar_lea.sflag [#allocation6], %s232
        %s234 = sand.u32 %s109, 1
        %s235 = smul.addr %s234, 8
        %s236 = scalar_lea.vmem [#allocation9], %s235
        %s237 = smul.u32 2, %s29
        %s238 = smul.u32 2, %s29
        %p240 = scmp.eq.s32.totalorder %s29, 0
        // Predicated region
        $region37: #{tpu_custom_call.1} parent=27 // pred_check
          %p241 = pneg %p240
        $region38: #{tpu_custom_call.1} parent=27 // pred_check_branch
          %243 = sbr.rel (%p241) target = $region40
        $region39: #{tpu_custom_call.1} parent=27 // pred_region
          %vm244 = vcmask 261120
          %245 = vst.msk [vmem:[#allocation2] sm:$0xff] %vm244, 0.0
          %vm246 = vcmask 7168
          %247 = vst.msk [vmem:[#allocation3] sm:$0xff] %vm246, 0.0
        $region40: #{tpu_custom_call.1} parent=27 // pred_fallthru
          _
        %v248 = vld [vmem:[%s210] sm:$0xff]
        %v249 = vld [vmem:[%s210 + $0x8] sm:$0xff]
        %v250 = vld [vmem:[%s200] sm:$0xff]
        %v251 = vld [vmem:[%s200 + $0x8] sm:$0xff]
        %v252 = vld [vmem:[%s200 + $0x10] sm:$0xff]
        %v253 = vld [vmem:[%s200 + $0x18] sm:$0xff]
        %v254 = vld [vmem:[%s200 + $0x20] sm:$0xff]
        %v255 = vld [vmem:[%s200 + $0x28] sm:$0xff]
        %v256 = vld [vmem:[%s200 + $0x30] sm:$0xff]
        %v257 = vld [vmem:[%s200 + $0x38] sm:$0xff]
        %vm258 = vcmp.gt.f32.partialorder %v248, 0.0
        %vm259 = vcmp.gt.f32.partialorder %v249, 0.0
        %v260 = vld [vmem:[#allocation3] sm:$0xff]
        %v261 = vsel %vm258, 1, 0
        %v262 = vsel %vm259, 1, 0
        %v263 = vcvt.s32.f32 %v261
        %v264 = vcvt.s32.f32 %v262
        %v265 = vadd.f32 %v263, %v264
        %266 = vadd.xlane.f32.xlu0 %v265
        %v267 = vpop.xlane.xlu0 %266
        %v268 = vadd.f32 %v260, %v267
        %vm269 = vcmask 7168
        %270 = vst.msk [vmem:[#allocation3] sm:$0xff] %vm269, %v268
        %v271 = vpack.c.bf16 %v263, %v263
        %v272 = vpack.c.bf16 %v264, %v264
        %v273 = vld [vmem:[#allocation2] sm:$0xff]
        %v274 = vpack.c.bf16 %v252, %v250
        %v275 = vpack.c.bf16 %v253, %v251
        %v276 = vpack.c.bf16 %v256, %v254
        %v277 = vpack.c.bf16 %v257, %v255
        %278 = vmatpush.bf16.xpose.msra.mxu0 0
        %279 = vmatpush.bf16.xpose.msra.mxu0 0
        %280 = vmatpush.bf16.xpose.msra.mxu0 0
        %281 = vmatpush.bf16.xpose.msra.mxu0 0
        %282 = vmatpush.bf16.xpose.msra.mxu0 0
        %283 = vmatpush.bf16.xpose.msra.mxu0 0
        %284 = vmatpush.bf16.xpose.msra.mxu0 %v276
        %285 = vmatpush.bf16.xpose.msra.mxu0 %v274
        %286 = vmatmul.bf16.gmra.mxu0 %v271
        %v287 = vpop.f32.mrf.mxu0
        %v288 = vadd.f32 0.0, %v287
        %v289 = vpop.f32.mrf.mxu0
        %290 = vdwg.mxu0
        %291 = vmatpush.bf16.xpose.msra.mxu0 0
        %292 = vmatpush.bf16.xpose.msra.mxu0 0
        %293 = vmatpush.bf16.xpose.msra.mxu0 0
        %294 = vmatpush.bf16.xpose.msra.mxu0 0
        %295 = vmatpush.bf16.xpose.msra.mxu0 0
        %296 = vmatpush.bf16.xpose.msra.mxu0 0
        %297 = vmatpush.bf16.xpose.msra.mxu0 %v277
        %298 = vmatpush.bf16.xpose.msra.mxu0 %v275
        %299 = vmatmul.bf16.gmra.mxu0 %v272
        %v300 = vpop.f32.mrf.mxu0
        %v301 = vadd.f32 %v288, %v300
        %v302 = vpop.f32.mrf.mxu0
        %303 = vdwg.mxu0
        %v304 = vadd.f32 %v273, %v301
        %vm305 = vcmask 261120
        %306 = vst.msk [vmem:[#allocation2] sm:$0xff] %vm305, %v304
        // Predicated region
        $region41: #{tpu_custom_call.1} parent=27 // pred_check
          %p307 = pneg %p240
        $region42: #{tpu_custom_call.1} parent=27 // pred_check_branch
          %309 = sbr.rel (%p307) target = $region44
        $region43: #{tpu_custom_call.1} parent=27 // pred_region
          %v310 = vld [vmem:[#allocation3] sm:$0xff]
          %v311 = vadd.f32 %v310, 1e-08
          %v312 = vrcp.pop %v311
          %v313 = vmul.f32 %v311, %v312
          %v314 = vsub.f32 1.0, %v313
          %v315 = vmul.f32 %v312, %v314
          %v316 = vadd.f32 %v312, %v315
          %vm317 = vweird.f32 %v311
          %vm318 = vweird.f32 %v312
          %vm319 = vmor %vm317, %vm318
          %v320 = vsel %vm319, %v312, %v316
          %v321 = vand.u32 2147483647, %v311
          %vm322 = vcmp.eq.f32.partialorder %v321, 8.507059e+37
          %v323 = vand.u32 %v311, 2147483648
          %v324 = vor.u32 1.1754944e-38, %v323
          %v325 = vsel %vm322, %v324, %v320
          %v326 = vmul.f32 1.0, %v325
          %v327 = vld [vmem:[#allocation2] sm:$0xff]
          %329 = vset.pattern.permute.xlu0 0
          %330 = vperm.xlu0 %329, %v326
          %v331 = vpop.permute.xlu0 %330
          %v333 = vmul.f32 %v327, %v331
          %334 = vst.msk [vmem:[%s236] sm:$0xff] %vm305, %v333
        $region44: #{tpu_custom_call.1} parent=27 // pred_fallthru
          _
        %s335 = sand.u32 %s109, 1
        %s336 = scalar_lea.sflag [#allocation6], %s335
        %s337 = sand.u32 %s109, 1
        %s338 = smul.addr %s337, 8
        %s339 = scalar_lea.vmem [#allocation9], %s338
        // Predicated region
        $region45: #{tpu_custom_call.1} parent=27 // pred_check
          %p340 = pneg %p119
        $region46: #{tpu_custom_call.1} parent=27 // pred_check_branch
          %342 = sbr.rel (%p340) target = $region48
        $region47: #{tpu_custom_call.1} parent=27 // pred_region
          %344 = vsyncadd %s336, 0
          %s345 = sadd.s32 %s28, %s27
          %s346 = smul.addr %s345, 8
          %s347 = scalar_lea.hbm %s2, %s346
          %s349 = sshll.u32 %s339, 4
          %s350 = int_to_ptr.vmem [resolvable:$true] %s349
          %s351 = sshll.u32 %s347, 4
          %s352 = int_to_ptr.hbm [resolvable:$true] %s351
          %354 = dma.vmem_to_hbm [thread:$0]  %s350, 128, %s352, %s336
        $region48: #{tpu_custom_call.1} parent=27 // pred_fallthru
          _
      $region28: #{tpu_custom_call.1} parent=5 // pred_fallthru
        _
      %p355 = scmp.le.s32.totalorder 2, %s17
      // Predicated region
      $region49: #{tpu_custom_call.1} parent=5 // pred_check
        %p356 = pneg %p355
      $region50: #{tpu_custom_call.1} parent=5 // pred_check_branch
        %358 = sbr.rel (%p356) target = $region52
      $region51: #{tpu_custom_call.1} parent=5 // pred_region
        %s359 = ssub.s32 %s17, 2
        // Predicated region
        $region53: #{tpu_custom_call.1} parent=51 // pred_check
          %p360 = pneg %p125
        $region54: #{tpu_custom_call.1} parent=51 // pred_check_branch
          %362 = sbr.rel (%p360) target = $region56
        $region55: #{tpu_custom_call.1} parent=51 // pred_region
          %s363 = sand.u32 %s110, 1
          %s364 = scalar_lea.sflag [#allocation6], %s363
          %s365 = sand.u32 %s110, 1
          %s366 = smul.addr %s365, 8
          %s367 = scalar_lea.vmem [#allocation9], %s366
          %369 = dma.done %s364, 128
        $region56: #{tpu_custom_call.1} parent=51 // pred_fallthru
          _
      $region52: #{tpu_custom_call.1} parent=5 // pred_fallthru
        _
    $region6: #{tpu_custom_call.1} parent=1 // loop_footer
      %s21 = sadd.s32 1, %s17
    $region7: #{tpu_custom_call.1} parent=1 // loop_footer_branch
      %16 = sbr.rel target = $region3
    $region8: #{tpu_custom_call.1} parent=1 // loop_exit
      _
    %370 = vsyncpa [#allocation5], 1
    %s371 = scalar_lea.sflag [#allocation5], 1
    %372 = vsyncpa %s371, 1
    %373 = vsyncpa [#allocation8], 1
    %s374 = scalar_lea.sflag [#allocation8], 1
    %375 = vsyncpa %s374, 1
    %376 = vsyncpa [#allocation6], 1
    %s377 = scalar_lea.sflag [#allocation6], 1
    %378 = vsyncpa %s377, 1

</llo_original>
